<compile_context>
chip_gen: v7x
topology: tpu7x:2x2x1
jax: 0.10.0
libtpu: 0.0.40
codegen_flags: <defaults>
</compile_context>

<pallas_src>
import functools

import jax
import jax.numpy as jnp
from jax.experimental import pallas as pl
from jax.experimental.pallas import tpu as pltpu


def _round_up(x, m):
    return (x + m - 1) // m * m


def _pad1d(x, n, fill):
    pad = n - x.shape[0]
    if pad == 0:
        return x
    return jnp.concatenate([x, jnp.full((pad,), fill, x.dtype)], axis=0)


def _vmem_budget_bytes():
    """Generation-aware VMEM budget (leave headroom below physical capacity)."""
    try:
        cap = int(pltpu.get_tpu_info().vmem_capacity_bytes)
    except Exception:
        cap = 64 * 1024 * 1024          # conservative (v7x-sized) fallback
    return max(32 * 1024 * 1024, cap * 3 // 4)


def _auto_block_b(batch, n_pad, e_pad, vmem_budget):
    """Pick TB (multiple of 128, <=2048) so one-hot intermediates fit comfortably."""
    # ~3 live [n_pad, 2*TB] f32 temporaries (iota, compare, one-hot) + the gathered
    # [e_pad, 2*TB] result + double-buffered id/label streams.
    per_col_bytes = (3 * n_pad + e_pad) * 2 * 4 + 2 * 2 * 2 * 4
    resident = e_pad * n_pad * 4
    avail = max(vmem_budget // 2 - resident, 128 * per_col_bytes)
    tb = (avail // per_col_bytes) // 128 * 128
    tb = max(128, min(2048, int(tb)))
    return min(tb, _round_up(batch, 128))


def _disc_loss_kernel(table_hbm, ids_ref, labmask_ref, out_ref,
                      table_vmem, bce_acc, l2_acc, dma_sem,
                      *, emd_size, tb, lambda_dis, inv_batch):
    i = pl.program_id(0)

    @pl.when(i == 0)
    def _init():
        # Copy the (bias-augmented, transposed) table HBM -> VMEM exactly once;
        # it stays resident in this single-buffered scratch for all grid steps.
        cp = pltpu.make_async_copy(table_hbm, table_vmem, dma_sem)
        cp.start()
        cp.wait()
        bce_acc[...] = jnp.zeros_like(bce_acc)
        l2_acc[...] = jnp.zeros_like(l2_acc)

    table_t = table_vmem[...]                    # [E_pad, n_pad]
    n_pad = table_t.shape[1]

    ids = ids_ref[0]                             # [1, 2*TB] int32: node | neighbor
    lm = labmask_ref[0]                          # [1, 2*TB] f32:  label | mask
    label = lm[:, :tb]                           # [1, TB]
    mask = lm[:, tb:]                            # [1, TB] (1.0 real row, 0.0 padding)

    # Merged one-hot gather: ONE iota+compare and ONE MXU matmul produce node
    # embeddings, neighbor embeddings and the gathered bias simultaneously.
    row_ids = jax.lax.broadcasted_iota(jnp.int32, (n_pad, 2 * tb), 0)
    oh = (row_ids == ids).astype(table_t.dtype)                        # [n_pad, 2*TB]
    g = jnp.dot(table_t, oh, preferred_element_type=jnp.float32)       # [E_pad, 2*TB]

    ne_t = g[:emd_size, :tb]                     # [E, TB]  node embeddings (unmasked)
    nb_t = g[:emd_size, tb:]                     # [E, TB]  neighbor embeddings
    b_ng = g[emd_size:emd_size + 1, tb:]         # [1, TB]  bias[neighbor] (folded row)

    # score = sum(node_emb * neigh_emb, dim=1) + bias
    score = jnp.sum(ne_t * nb_t, axis=0, keepdims=True) + b_ng          # [1, TB]

    # binary_cross_entropy_with_logits: max(s,0) - s*y + log(1 + exp(-|s|))
    bce = (jnp.maximum(score, 0.0) - score * label
           + jnp.log1p(jnp.exp(-jnp.abs(score)))) * mask                # [1, TB]

    # l2_loss(x) = sum(x**2)/2; mask applied only to the [1,TB] partial sum so
    # padded lanes (which gather row 0) cannot leak into the L2 term.
    l2 = (jnp.sum(ne_t * ne_t + nb_t * nb_t, axis=0, keepdims=True)
          + b_ng * b_ng) * mask                                         # [1, TB]

    bce_acc[...] += bce
    l2_acc[...] += l2

    @pl.when(i == pl.num_programs(0) - 1)
    def _finalize():
        out_ref[0, 0] = (jnp.sum(bce_acc[...]) * inv_batch
                         + lambda_dis * 0.5 * jnp.sum(l2_acc[...]))


def discriminator_loss(node_emd, bias_vector, node_ids, neighbor_ids, label,
                       lambda_dis, block_b=None):
    """Forward pass of Discriminator: returns the scalar loss (float32)."""
    n_node, emd_size = node_emd.shape
    batch = node_ids.shape[0]

    e_pad = _round_up(emd_size + 1, 8)        # embeddings + bias row, sublane-padded
    n_pad = _round_up(n_node, 128)            # lane-dense table / one-hot contraction

    vmem_budget = _vmem_budget_bytes()
    if block_b is None:
        block_b = _auto_block_b(batch, n_pad, e_pad, vmem_budget)
    tb = int(block_b)
    assert tb % 128 == 0
    b_pad = _round_up(batch, tb)
    num_tiles = b_pad // tb

    # Bias-augmented transposed table: rows [0,E) = emb.T, row E = bias, rest zero.
    # TODO(synk): in a training loop keep this pre-packed across steps instead of
    #             rebuilding it (and the id/label tiles) every call.
    table_aug = jnp.zeros((e_pad, n_pad), jnp.float32)
    table_aug = table_aug.at[:emd_size, :n_node].set(node_emd.astype(jnp.float32).T)
    table_aug = table_aug.at[emd_size, :n_node].set(bias_vector.astype(jnp.float32))

    nid = _pad1d(node_ids.astype(jnp.int32), b_pad, 0).reshape(num_tiles, 1, tb)
    bid = _pad1d(neighbor_ids.astype(jnp.int32), b_pad, 0).reshape(num_tiles, 1, tb)
    lab = _pad1d(label.astype(jnp.float32), b_pad, 0.0).reshape(num_tiles, 1, tb)
    msk = _pad1d(jnp.ones((batch,), jnp.float32), b_pad, 0.0).reshape(num_tiles, 1, tb)

    ids = jnp.concatenate([nid, bid], axis=2)         # [nt, 1, 2*tb]  node | neighbor
    labmask = jnp.concatenate([lab, msk], axis=2)     # [nt, 1, 2*tb]  label | mask

    kernel = functools.partial(_disc_loss_kernel, emd_size=emd_size, tb=tb,
                               lambda_dis=float(lambda_dis),
                               inv_batch=1.0 / float(batch))

    out = pl.pallas_call(
        kernel,
        out_shape=jax.ShapeDtypeStruct((1, 1), jnp.float32),
        grid=(num_tiles,),
        in_specs=[
            pl.BlockSpec(memory_space=pl.ANY),                  # table+bias (HBM, copied once)
            pl.BlockSpec((1, 1, 2 * tb), lambda i: (i, 0, 0)),  # ids, lane-packed
            pl.BlockSpec((1, 1, 2 * tb), lambda i: (i, 0, 0)),  # label|mask, lane-packed
        ],
        out_specs=pl.BlockSpec(memory_space=pltpu.SMEM),
        scratch_shapes=[
            pltpu.VMEM((e_pad, n_pad), jnp.float32),   # resident table (single copy)
            pltpu.VMEM((1, tb), jnp.float32),          # bce per-lane partial sums
            pltpu.VMEM((1, tb), jnp.float32),          # l2 per-lane partial sums
            pltpu.SemaphoreType.DMA,                   # table copy semaphore
        ],
        compiler_params=pltpu.CompilerParams(
            dimension_semantics=("arbitrary",),        # reduction over batch tiles
            vmem_limit_bytes=int(vmem_budget),
        ),
    )(table_aug, ids, labmask)
    return out[0, 0]


def _reference_loss(node_emd, bias_vector, node_ids, neighbor_ids, label, lambda_dis):
    ne = jnp.take(node_emd, node_ids, axis=0)
    nb = jnp.take(node_emd, neighbor_ids, axis=0)
    bias = jnp.take(bias_vector, neighbor_ids, axis=0)
    score = jnp.sum(ne * nb, axis=1) + bias
    bce = jnp.maximum(score, 0.0) - score * label + jnp.log1p(jnp.exp(-jnp.abs(score)))
    l2 = 0.5 * (jnp.sum(ne * ne) + jnp.sum(nb * nb) + jnp.sum(bias * bias))
    return jnp.mean(bce) + lambda_dis * l2


if __name__ == "__main__":
    key = jax.random.PRNGKey(0)
    k_emb, k_bias, k_nid, k_nbid, k_lab = jax.random.split(key, 5)

    n_node, emd_size = 256, 32      # node_emd_init.shape
    batch = 300                     # non-multiple of the tile -> exercises masking
    lambda_dis = 1e-5

    # deterministic params (bias nonzero to exercise the folded-bias path)
    node_emd = jax.random.normal(k_emb, (n_node, emd_size), dtype=jnp.float32) * 0.1
    bias_vector = jax.random.normal(k_bias, (n_node,), dtype=jnp.float32) * 0.01

    node_ids = jax.random.randint(k_nid, (batch,), 0, n_node, dtype=jnp.int32)
    neighbor_ids = jax.random.randint(k_nbid, (batch,), 0, n_node, dtype=jnp.int32)
    label = jax.random.bernoulli(k_lab, 0.5, (batch,)).astype(jnp.float32)

    ref = _reference_loss(node_emd, bias_vector, node_ids, neighbor_ids,
                          label, lambda_dis)

    # multi-tile path: block_b=128 forces 3 tiles + 84 masked pad rows
    loss_tiled = jax.block_until_ready(
        discriminator_loss(node_emd, bias_vector, node_ids, neighbor_ids,
                           label, lambda_dis, block_b=128))
    # auto-sized (generation-aware) single-tile path
    loss_auto = jax.block_until_ready(
        discriminator_loss(node_emd, bias_vector, node_ids, neighbor_ids,
                           label, lambda_dis))

    assert jnp.allclose(loss_tiled, ref, rtol=1e-4, atol=1e-5), (loss_tiled, ref)
    assert jnp.allclose(loss_auto, ref, rtol=1e-4, atol=1e-5), (loss_auto, ref)

    print("KERNEL_OK")
</pallas_src>

<mosaic_0001>
module attributes {stable_mosaic.version = 11 : i64} {
  func.func @_disc_loss_kernel(%arg0: i32, %arg1: memref<40x256xf32, #tpu.memory_space<any>>, %arg2: memref<1x1x256xi32, #tpu.memory_space<vmem>>, %arg3: memref<1x1x256xf32, #tpu.memory_space<vmem>>, %arg4: memref<1x1xf32, #tpu.memory_space<smem>>, %arg5: memref<40x256xf32, #tpu.memory_space<vmem>>, %arg6: memref<1x128xf32, #tpu.memory_space<vmem>>, %arg7: memref<1x128xf32, #tpu.memory_space<vmem>>, %arg8: memref<!tpu.dma_semaphore, #tpu.memory_space<semaphore_mem>>) attributes {dimension_semantics = [#tpu.dimension_semantics<arbitrary>], iteration_bounds = array<i64: 3>, scalar_prefetch = 0 : i64, scratch_operands = 4 : i64, tpu.core_type = #tpu.core_type<tc>, window_params = [{}, {transform_indices = @transform_1, window_bounds = array<i64: 1, 1, 256>}, {transform_indices = @transform_2, window_bounds = array<i64: 1, 1, 256>}, {transform_indices = @transform_3, window_bounds = array<i64: 1, 1>}]} {
    %c0_i32 = arith.constant 0 : i32
    %0 = arith.cmpi eq, %arg0, %c0_i32 : i32
    %1 = arith.extui %0 : i1 to i32
    %c0_i32_0 = arith.constant 0 : i32
    %2 = arith.cmpi ne, %1, %c0_i32_0 : i32
    scf.if %2 {
      tpu.enqueue_dma source(%arg1 : memref<40x256xf32, #tpu.memory_space<any>>) target(%arg5 : memref<40x256xf32, #tpu.memory_space<vmem>>) target_semaphore(%arg8 : memref<!tpu.dma_semaphore, #tpu.memory_space<semaphore_mem>>)
      tpu.wait_dma2 semaphore(%arg8 : memref<!tpu.dma_semaphore, #tpu.memory_space<semaphore_mem>>) src(%arg1 : memref<40x256xf32, #tpu.memory_space<any>>) dst(%arg5 : memref<40x256xf32, #tpu.memory_space<vmem>>)
      %cst_21 = arith.constant 0.000000e+00 : f32
      %51 = vector.broadcast %cst_21 : f32 to vector<1x128xf32>
      %c0_22 = arith.constant 0 : index
      %c0_23 = arith.constant 0 : index
      %52 = vector.load %arg6[%c0_22, %c0_23] : memref<1x128xf32, #tpu.memory_space<vmem>>, vector<1x128xf32>
      tpu.vector_store %arg6[%c0_22, %c0_23], %51 {strides = array<i32>} : memref<1x128xf32, #tpu.memory_space<vmem>>, vector<1x128xf32>,
      %cst_24 = arith.constant 0.000000e+00 : f32
      %53 = vector.broadcast %cst_24 : f32 to vector<1x128xf32>
      %c0_25 = arith.constant 0 : index
      %c0_26 = arith.constant 0 : index
      %54 = vector.load %arg7[%c0_25, %c0_26] : memref<1x128xf32, #tpu.memory_space<vmem>>, vector<1x128xf32>
      tpu.vector_store %arg7[%c0_25, %c0_26], %53 {strides = array<i32>} : memref<1x128xf32, #tpu.memory_space<vmem>>, vector<1x128xf32>,
    } else {
    }
    %c0 = arith.constant 0 : index
    %c0_1 = arith.constant 0 : index
    %3 = vector.load %arg5[%c0, %c0_1] : memref<40x256xf32, #tpu.memory_space<vmem>>, vector<40x256xf32>
    %c0_2 = arith.constant 0 : index
    %c0_3 = arith.constant 0 : index
    %c0_4 = arith.constant 0 : index
    %4 = vector.load %arg2[%c0_2, %c0_3, %c0_4] : memref<1x1x256xi32, #tpu.memory_space<vmem>>, vector<1x1x256xi32>
    %5 = vector.shape_cast %4 : vector<1x1x256xi32> to vector<1x256xi32>
    %c0_5 = arith.constant 0 : index
    %c0_6 = arith.constant 0 : index
    %c0_7 = arith.constant 0 : index
    %6 = vector.load %arg3[%c0_5, %c0_6, %c0_7] : memref<1x1x256xf32, #tpu.memory_space<vmem>>, vector<1x1x256xf32>
    %7 = vector.shape_cast %6 : vector<1x1x256xf32> to vector<1x256xf32>
    %8 = vector.extract_strided_slice %7 {offsets = [0, 0], sizes = [1, 128], strides = [1, 1]} : vector<1x256xf32> to vector<1x128xf32>
    %9 = vector.extract_strided_slice %7 {offsets = [0, 128], sizes = [1, 128], strides = [1, 1]} : vector<1x256xf32> to vector<1x128xf32>
    %10 = tpu.iota {dimensions = array<i32: 0>} : vector<256x256xi32>
    %11 = vector.broadcast %5 : vector<1x256xi32> to vector<256x256xi32>
    %12 = arith.cmpi eq, %10, %11 : vector<256x256xi32>
    %13 = arith.extui %12 : vector<256x256xi1> to vector<256x256xi32>
    %14 = arith.sitofp %13 : vector<256x256xi32> to vector<256x256xf32>
    %cst = arith.constant dense<0.000000e+00> : vector<40x256xf32>
    %15 = tpu.matmul %3, %14, %cst {dimension_numbers = #tpu.dot_dimension_numbers<[1], [0], [0], [1], [0, 0, 1, 1], [], []>} : vector<40x256xf32>, vector<256x256xf32>, vector<40x256xf32> -> vector<40x256xf32>
    %16 = vector.extract_strided_slice %15 {offsets = [0, 0], sizes = [32, 128], strides = [1, 1]} : vector<40x256xf32> to vector<32x128xf32>
    %17 = vector.extract_strided_slice %15 {offsets = [0, 128], sizes = [32, 128], strides = [1, 1]} : vector<40x256xf32> to vector<32x128xf32>
    %18 = vector.extract_strided_slice %15 {offsets = [32, 128], sizes = [1, 128], strides = [1, 1]} : vector<40x256xf32> to vector<1x128xf32>
    %19 = arith.mulf %16, %17 : vector<32x128xf32>
    %cst_8 = arith.constant dense<0.000000e+00> : vector<128xf32>
    %20 = vector.multi_reduction <add>, %19, %cst_8 [0] : vector<32x128xf32> to vector<128xf32>
    %21 = vector.shape_cast %20 : vector<128xf32> to vector<1x128xf32>
    %22 = arith.addf %21, %18 : vector<1x128xf32>
    %cst_9 = arith.constant 0.000000e+00 : f32
    %23 = vector.broadcast %cst_9 : f32 to vector<1x128xf32>
    %24 = arith.maximumf %22, %23 : vector<1x128xf32>
    %25 = arith.mulf %22, %8 : vector<1x128xf32>
    %26 = arith.subf %24, %25 : vector<1x128xf32>
    %27 = math.absf %22 : vector<1x128xf32>
    %cst_10 = arith.constant 0.000000e+00 : f32
    %28 = vector.broadcast %cst_10 : f32 to vector<1x128xf32>
    %29 = arith.subf %28, %27 : vector<1x128xf32>
    %30 = math.exp %29 : vector<1x128xf32>
    %31 = math.log1p %30 : vector<1x128xf32>
    %32 = arith.addf %26, %31 : vector<1x128xf32>
    %33 = arith.mulf %32, %9 : vector<1x128xf32>
    %34 = arith.mulf %16, %16 : vector<32x128xf32>
    %35 = arith.mulf %17, %17 : vector<32x128xf32>
    %36 = arith.addf %34, %35 : vector<32x128xf32>
    %cst_11 = arith.constant dense<0.000000e+00> : vector<128xf32>
    %37 = vector.multi_reduction <add>, %36, %cst_11 [0] : vector<32x128xf32> to vector<128xf32>
    %38 = vector.shape_cast %37 : vector<128xf32> to vector<1x128xf32>
    %39 = arith.mulf %18, %18 : vector<1x128xf32>
    %40 = arith.addf %38, %39 : vector<1x128xf32>
    %41 = arith.mulf %40, %9 : vector<1x128xf32>
    %c0_12 = arith.constant 0 : index
    %c0_13 = arith.constant 0 : index
    %42 = vector.load %arg6[%c0_12, %c0_13] : memref<1x128xf32, #tpu.memory_space<vmem>>, vector<1x128xf32>
    %43 = arith.addf %42, %33 : vector<1x128xf32>
    %c0_14 = arith.constant 0 : index
    %c0_15 = arith.constant 0 : index
    %44 = vector.load %arg6[%c0_14, %c0_15] : memref<1x128xf32, #tpu.memory_space<vmem>>, vector<1x128xf32>
    tpu.vector_store %arg6[%c0_14, %c0_15], %43 {strides = array<i32>} : memref<1x128xf32, #tpu.memory_space<vmem>>, vector<1x128xf32>,
    %c0_16 = arith.constant 0 : index
    %c0_17 = arith.constant 0 : index
    %45 = vector.load %arg7[%c0_16, %c0_17] : memref<1x128xf32, #tpu.memory_space<vmem>>, vector<1x128xf32>
    %46 = arith.addf %45, %41 : vector<1x128xf32>
    %c0_18 = arith.constant 0 : index
    %c0_19 = arith.constant 0 : index
    %47 = vector.load %arg7[%c0_18, %c0_19] : memref<1x128xf32, #tpu.memory_space<vmem>>, vector<1x128xf32>
    tpu.vector_store %arg7[%c0_18, %c0_19], %46 {strides = array<i32>} : memref<1x128xf32, #tpu.memory_space<vmem>>, vector<1x128xf32>,
    %c2_i32 = arith.constant 2 : i32
    %48 = arith.cmpi eq, %arg0, %c2_i32 : i32
    %49 = arith.extui %48 : i1 to i32
    %c0_i32_20 = arith.constant 0 : i32
    %50 = arith.cmpi ne, %49, %c0_i32_20 : i32
    scf.if %50 {
      %c0_21 = arith.constant 0 : index
      %c0_22 = arith.constant 0 : index
      %51 = vector.load %arg6[%c0_21, %c0_22] : memref<1x128xf32, #tpu.memory_space<vmem>>, vector<1x128xf32>
      %52 = vector.shape_cast %51 : vector<1x128xf32> to vector<1x1x128xf32>
      %cst_23 = arith.constant dense<0.000000e+00> : vector<1xf32>
      %53 = vector.multi_reduction <add>, %52, %cst_23 [1, 2] : vector<1x1x128xf32> to vector<1xf32>
      %54 = vector.shape_cast %53 : vector<1xf32> to vector<1x1x1xf32>
      %55 = vector.extract %54[0, 0, 0] : f32 from vector<1x1x1xf32>
      %cst_24 = arith.constant 0.00333333341 : f32
      %56 = arith.mulf %55, %cst_24 : f32
      %c0_25 = arith.constant 0 : index
      %c0_26 = arith.constant 0 : index
      %57 = vector.load %arg7[%c0_25, %c0_26] : memref<1x128xf32, #tpu.memory_space<vmem>>, vector<1x128xf32>
      %58 = vector.shape_cast %57 : vector<1x128xf32> to vector<1x1x128xf32>
      %cst_27 = arith.constant dense<0.000000e+00> : vector<1xf32>
      %59 = vector.multi_reduction <add>, %58, %cst_27 [1, 2] : vector<1x1x128xf32> to vector<1xf32>
      %60 = vector.shape_cast %59 : vector<1xf32> to vector<1x1x1xf32>
      %61 = vector.extract %60[0, 0, 0] : f32 from vector<1x1x1xf32>
      %cst_28 = arith.constant 5.000000e-06 : f32
      %62 = arith.mulf %cst_28, %61 : f32
      %63 = arith.addf %56, %62 : f32
      %c0_29 = arith.constant 0 : index
      %c0_30 = arith.constant 0 : index
      %64 = memref.load %arg4[%c0_29, %c0_30] : memref<1x1xf32, #tpu.memory_space<smem>>
      memref.store %63, %arg4[%c0_29, %c0_30] : memref<1x1xf32, #tpu.memory_space<smem>>
    } else {
    }
    return
  }
  func.func @transform_1(%arg0: i32) -> (i32, i32, i32) {
    %c0_i32 = arith.constant 0 : i32
    %c0_i32_0 = arith.constant 0 : i32
    %c0_i32_1 = arith.constant 0 : i32
    return %arg0, %c0_i32, %c0_i32_0 : i32, i32, i32
  }
  func.func @transform_2(%arg0: i32) -> (i32, i32, i32) {
    %c0_i32 = arith.constant 0 : i32
    %c0_i32_0 = arith.constant 0 : i32
    %c0_i32_1 = arith.constant 0 : i32
    return %arg0, %c0_i32, %c0_i32_0 : i32, i32, i32
  }
  func.func @transform_3(%arg0: i32) -> (i32, i32) {
    %c0_i32 = arith.constant 0 : i32
    %c0_i32_0 = arith.constant 0 : i32
    %c0_i32_1 = arith.constant 0 : i32
    return %c0_i32, %c0_i32_0 : i32, i32
  }
}

</mosaic_0001>

<llo_original>
// kernel: tpu_custom_call.1
$region0: #{tpu_custom_call.1}
  #allocation0 [shape = 'u32[]', space=smem, size = 0x4, offset = 0x4, fixed_abs, tag = 'smem constant byte address 0x4 - core index']
  #allocation1 [shape = 'u32[144,128]{1,0:T(1,128)}', space=vmem, size = 0x12000, scoped, tag = 'internal scratch']
  #allocation2 [shape = 'f32[40,256]{1,0:T(8,128)}', space=vmem, size = 0xa000, scoped, tag = 'scratch operand']
  #allocation3 [shape = 'f32[1,128]{1,0:T(1,128)}', space=vmem, size = 0x200, scoped, tag = 'scratch operand']
  #allocation4 [shape = 'f32[1,128]{1,0:T(1,128)}', space=vmem, size = 0x200, scoped, tag = 'scratch operand']
  #allocation5 [shape = 's32[1]{0}', space=sflag, size = 0x4, scoped, tag = 'scratch operand']
  #allocation10 [shape = 's32[]', space=sflag, size = 0x4, offset = 0, fixed_abs, tag = 'sflag constant byte address 0x0 - dummy sync flag']
  #allocation11 [shape = 's32[]', space=sflag, size = 0x4, offset = 0, fixed_abs, tag = 'sflag constant byte address 0x0 - dummy sync flag']
  #allocation12 [shape = 'u32[]', space=smem, size = 0x4, offset = 0x44, fixed_abs, tag = 'smem constant byte address 0x44 - assertion arg 0']
  #allocation13 [shape = 'u32[]', space=smem, size = 0x4, offset = 0x48, fixed_abs, tag = 'smem constant byte address 0x48 - assertion arg 1']
  %s0 = inlined_call_operand.hbm [shape: f32[40,256], index: 0, kind: input, shape index: {}]
  %s1 = inlined_call_operand.hbm [shape: s32[3,1,256], index: 1, kind: input, shape index: {}]
  %s2 = inlined_call_operand.vmem [shape: f32[3,1,256], index: 2, kind: input, shape index: {}]
  %s3 = inlined_call_operand.hbm [shape: f32[1,1], index: 3, kind: output, shape index: {}]
  %s4 = sld [smem:[#allocation0]]
  $region57: #{tpu_custom_call.1} parent=0
    _
  %s6 = ssub.s32 1, %s4
  %s7 = scalar_select 0, %s6, %s4
  $region1: #{tpu_custom_call.1} parent=0
    #allocation6 [shape = 'u8[2048]{0}', space=vmem, size = 0x800, scoped, tag = 'input window, operand 1']
    #allocation7 [shape = 's32[2]{0}', space=sflag, size = 0x8, scoped, tag = 'scoped memory for tpu_custom_call.1']
    #allocation8 [shape = 's32[2]{0}', space=sflag, size = 0x8, scoped, tag = 'scoped memory for tpu_custom_call.1']
    #allocation9 [shape = 'u8[512]{0}', space=smem, size = 0x200, scoped, tag = 'output window, operand 0, single buffered']
    %8 = vsyncpa [#allocation7], 0
    %s9 = scalar_lea.sflag [#allocation7], 1
    %10 = vsyncpa %s9, 0
    %11 = vsyncpa [#allocation8], 0
    loop: start=0, step=1, limit=5
    $region2: #{tpu_custom_call.1} parent=1 // loop_pre_header
      _
    $region3: #{tpu_custom_call.1} parent=1 // loop_header
      %s13 = sphi 0, %s17
      %p14 = scmp.ge.s32.totalorder %s13, 5
      %s23 = sphi 0, %s25
      %s26 = sphi 0, %s23
      %s27 = sphi 0, %s26
      %s43 = sphi 0, %s27
      %s49 = sphi 0, %s51
      %s52 = sphi 0, %s49
      %s53 = sphi 0, %s52
      %s69 = sphi 0, %s53
      %s73 = sphi 0, %s73
      %s75 = sphi 0, %s73
      %s76 = sphi 0, %s75
      %s90 = sphi 0, %s76
    $region4: #{tpu_custom_call.1} parent=1 // loop_header_branch
      %16 = sbr.rel (%p14) target = $region8
    $region5: #{tpu_custom_call.1} parent=1 // loop_body
      %s18 = ssub.s32 %s13, 1
      %s19 = ssub.s32 %s13, 2
      %s20 = sadd.s32 %s13, 1
      %s21 = ssub.s32 %s13, %s20
      %p22 = scmp.eq.s32.totalorder %s21, 0
      %s24 = sadd.s32 %s23, 1
      %s25 = scalar_select %p22, %s23, %s24
      %p28 = pneg %p22
      %p29 = scmp.eq.s32.totalorder %s13, 2
      %p30 = por %p28, %p29
      %p31 = scmp.ne.s32.totalorder %s23, %s26
      %p32 = scmp.eq.s32.totalorder %s13, 0
      %p33 = por %p31, %p32
      %p34 = scmp.ne.s32.totalorder %s23, %s26
      %p35 = scmp.eq.s32.totalorder %s18, 2
      %p36 = por %p34, %p35
      %p37 = scmp.ne.s32.totalorder %s26, %s27
      %p38 = scmp.eq.s32.totalorder %s18, 0
      %p39 = por %p37, %p38
      %p40 = scmp.ne.s32.totalorder %s26, %s27
      %p41 = scmp.eq.s32.totalorder %s19, 2
      %p42 = por %p40, %p41
      %p44 = scmp.ne.s32.totalorder %s27, %s43
      %p45 = scmp.eq.s32.totalorder %s19, 0
      %p46 = por %p44, %p45
      %s47 = ssub.s32 %s13, %s20
      %p48 = scmp.eq.s32.totalorder %s47, 0
      %s50 = sadd.s32 %s49, 1
      %s51 = scalar_select %p48, %s49, %s50
      %p54 = pneg %p48
      %p55 = scmp.eq.s32.totalorder %s13, 2
      %p56 = por %p54, %p55
      %p57 = scmp.ne.s32.totalorder %s49, %s52
      %p58 = scmp.eq.s32.totalorder %s13, 0
      %p59 = por %p57, %p58
      %p60 = scmp.ne.s32.totalorder %s49, %s52
      %p61 = scmp.eq.s32.totalorder %s18, 2
      %p62 = por %p60, %p61
      %p63 = scmp.ne.s32.totalorder %s52, %s53
      %p64 = scmp.eq.s32.totalorder %s18, 0
      %p65 = por %p63, %p64
      %p66 = scmp.ne.s32.totalorder %s52, %s53
      %p67 = scmp.eq.s32.totalorder %s19, 2
      %p68 = por %p66, %p67
      %p70 = scmp.ne.s32.totalorder %s53, %s69
      %p71 = scmp.eq.s32.totalorder %s19, 0
      %p72 = por %p70, %p71
      %s74 = sadd.s32 %s73, 1
      %p77 = scmp.eq.s32.totalorder %s13, 2
      %p78 = scmp.ne.s32.totalorder %s73, %s75
      %p79 = scmp.eq.s32.totalorder %s13, 0
      %p80 = por %p78, %p79
      %p81 = scmp.ne.s32.totalorder %s73, %s75
      %p82 = scmp.eq.s32.totalorder %s18, 2
      %p83 = por %p81, %p82
      %p84 = scmp.ne.s32.totalorder %s75, %s76
      %p85 = scmp.eq.s32.totalorder %s18, 0
      %p86 = por %p84, %p85
      %p87 = scmp.ne.s32.totalorder %s75, %s76
      %p88 = scmp.eq.s32.totalorder %s19, 2
      %p89 = por %p87, %p88
      %p91 = scmp.ne.s32.totalorder %s76, %s90
      %p92 = scmp.eq.s32.totalorder %s19, 0
      %p93 = por %p91, %p92
      %p94 = scmp.le.s32.totalorder 1, %s13
      %p95 = scmp.lt.s32.totalorder %s13, 4
      %p96 = pnand %p94, %p95
      %p97 = pneg %p96
      // Predicated region
      $region9: #{tpu_custom_call.1} parent=5 // pred_check
        _
      $region10: #{tpu_custom_call.1} parent=5 // pred_check_branch
        %99 = sbr.rel (%p96) target = $region12
      $region11: #{tpu_custom_call.1} parent=5 // pred_region
        %s100 = ssub.s32 %s13, 1
      $region12: #{tpu_custom_call.1} parent=5 // pred_fallthru
        _
      %p101 = scmp.lt.s32.totalorder %s13, 3
      // Predicated region
      $region13: #{tpu_custom_call.1} parent=5 // pred_check
        %p102 = pneg %p101
      $region14: #{tpu_custom_call.1} parent=5 // pred_check_branch
        %104 = sbr.rel (%p102) target = $region16
      $region15: #{tpu_custom_call.1} parent=5 // pred_region
        // Predicated region
        $region17: #{tpu_custom_call.1} parent=15 // pred_check
          %p105 = pneg %p33
        $region18: #{tpu_custom_call.1} parent=15 // pred_check_branch
          %107 = sbr.rel (%p105) target = $region20
        $region19: #{tpu_custom_call.1} parent=15 // pred_region
          %s108 = sand.u32 %s23, 1
          %s109 = scalar_lea.sflag [#allocation7], %s108
          %s110 = sand.u32 %s23, 1
          %s111 = smul.addr %s110, 2
          %s112 = scalar_lea.vmem [#allocation6], %s111
          %s114 = ssub.s32 32, 32
          %115 = vsyncadd %s109, %s114
          %s116 = smul.addr %s13, 2
          %s117 = smul.addr %s116, 16
          %s118 = scalar_lea.hbm %s1, %s117
          %s120 = sshll.u32 %s112, 4
          %s121 = int_to_ptr.vmem [resolvable:$true] %s120
          %123 = dma.hbm_to_vmem [thread:$0]  %s118, 32, %s121, %s109
        $region20: #{tpu_custom_call.1} parent=15 // pred_fallthru
          _
        // Predicated region
        $region21: #{tpu_custom_call.1} parent=15 // pred_check
          %p124 = pneg %p59
        $region22: #{tpu_custom_call.1} parent=15 // pred_check_branch
          %126 = sbr.rel (%p124) target = $region24
        $region23: #{tpu_custom_call.1} parent=15 // pred_region
          %p127 = scmp.lt.s32.totalorder %s13, 2
          %s128 = scalar_select %p127, %s13, 2
          %s129 = smul.addr %s128, 2
          %s130 = scalar_lea.vmem %s2, %s129
        $region24: #{tpu_custom_call.1} parent=15 // pred_fallthru
          _
      $region16: #{tpu_custom_call.1} parent=5 // pred_fallthru
        _
      %p131 = scmp.le.s32.totalorder 1, %s13
      %p132 = scmp.lt.s32.totalorder %s13, 4
      %p133 = pnand %p131, %p132
      %p134 = pneg %p133
      // Predicated region
      $region25: #{tpu_custom_call.1} parent=5 // pred_check
        _
      $region26: #{tpu_custom_call.1} parent=5 // pred_check_branch
        %136 = sbr.rel (%p133) target = $region28
      $region27: #{tpu_custom_call.1} parent=5 // pred_region
        %s137 = ssub.s32 %s13, 1
        %s138 = sand.u32 %s26, 1
        %s139 = scalar_lea.sflag [#allocation7], %s138
        %s140 = sand.u32 %s26, 1
        %s141 = smul.addr %s140, 2
        %s142 = scalar_lea.vmem [#allocation6], %s141
        // Predicated region
        $region29: #{tpu_custom_call.1} parent=27 // pred_check
          %p143 = pneg %p39
        $region30: #{tpu_custom_call.1} parent=27 // pred_check_branch
          %145 = sbr.rel (%p143) target = $region32
        $region31: #{tpu_custom_call.1} parent=27 // pred_region
          %146 = dma.done %s139, 32
        $region32: #{tpu_custom_call.1} parent=27 // pred_fallthru
          _
        %s147 = sand.u32 %s26, 1
        %s148 = scalar_lea.sflag [#allocation7], %s147
        %s149 = sand.u32 %s26, 1
        %s150 = smul.addr %s149, 2
        %s151 = scalar_lea.vmem [#allocation6], %s150
        %p152 = pneg %p39
        %p153 = pneg %p36
        %p154 = scmp.lt.s32.totalorder %s18, 2
        %s155 = scalar_select %p154, %s18, 2
        %s156 = smul.addr %s155, 2
        %s157 = scalar_lea.vmem %s2, %s156
        %p158 = pneg %p65
        %p159 = pneg %p62
        %p160 = pneg %p86
        %p161 = pneg %p83
        %p162 = scmp.lt.s32.totalorder %s18, 2
        %s163 = scalar_select %p162, %s18, 2
        %s164 = smul.addr %s163, 2
        %s165 = scalar_lea.vmem %s2, %s164
        %p166 = scmp.eq.s32.totalorder %s18, 0
        // Predicated region
        $region33: #{tpu_custom_call.1} parent=27 // pred_check
          %p167 = pneg %p166
        $region34: #{tpu_custom_call.1} parent=27 // pred_check_branch
          %169 = sbr.rel (%p167) target = $region36
        $region35: #{tpu_custom_call.1} parent=27 // pred_region
          // Predicated region
          $region37: #{tpu_custom_call.1} parent=35 // pred_check
            _
          $region38: #{tpu_custom_call.1} parent=35 // pred_check_branch
            %171 = sbr.rel target = $region40
          $region39: #{tpu_custom_call.1} parent=35 // pred_region
            %172 = sst [smem:[#allocation12]] [#allocation11]
            %173 = sst [smem:[#allocation13]] [#allocation10]
          $region40: #{tpu_custom_call.1} parent=35 // pred_fallthru
            _
          %175 = shalt.err (0)
          %s177 = sshll.u32 [#allocation2], 4
          %s178 = int_to_ptr.vmem [resolvable:$true] %s177
          %180 = dma.hbm_to_vmem [thread:$0]  %s0, 1280, %s178, [#allocation5]
          %s181 = smul.u32 8, 5
          %s182 = smul.u32 %s181, 2
          %s183 = sshll.u32 %s182, 4
          %184 = dma.done [#allocation5], %s183
          %185 = vst [vmem:[#allocation3] sm:$0x1] 0.0
          %186 = vst [vmem:[#allocation4] sm:$0x1] 0.0
        $region36: #{tpu_custom_call.1} parent=27 // pred_fallthru
          _
        %v187 = vld [vmem:[#allocation2] sm:$0xff]
        %v188 = vld [vmem:[#allocation2 + $0x8] sm:$0xff]
        %v189 = vld [vmem:[#allocation2 + $0x10] sm:$0xff]
        %v190 = vld [vmem:[#allocation2 + $0x18] sm:$0xff]
        %v191 = vld [vmem:[#allocation2 + $0x20] sm:$0xff]
        %v192 = vld [vmem:[#allocation2 + $0x28] sm:$0xff]
        %v193 = vld [vmem:[#allocation2 + $0x30] sm:$0xff]
        %v194 = vld [vmem:[#allocation2 + $0x38] sm:$0xff]
        %v195 = vld [vmem:[#allocation2 + $0x40] sm:$0xff]
        %v196 = vld [vmem:[#allocation2 + $0x48] sm:$0xff]
        %v197 = vld [vmem:[%s142] sm:$0x3]
        %v198 = vld [vmem:[%s165] sm:$0x3]
        %v199 = vlaneseq
        %v200 = vshrl.u32 %v199, 7
        %v201 = vadd.s32 %v200, 8
        %v202 = vadd.s32 %v200, 16
        %v203 = vadd.s32 %v200, 24
        %v204 = vadd.s32 %v200, 32
        %v205 = vadd.s32 %v200, 40
        %v206 = vadd.s32 %v200, 48
        %v207 = vadd.s32 %v200, 56
        %v208 = vadd.s32 %v200, 64
        %v209 = vadd.s32 %v200, 72
        %v210 = vadd.s32 %v200, 80
        %v211 = vadd.s32 %v200, 88
        %v212 = vadd.s32 %v200, 96
        %v213 = vadd.s32 %v200, 104
        %v214 = vadd.s32 %v200, 112
        %v215 = vadd.s32 %v200, 120
        %v216 = vadd.s32 %v200, 128
        %v217 = vadd.s32 %v200, 136
        %v218 = vadd.s32 %v200, 144
        %v219 = vadd.s32 %v200, 152
        %v220 = vadd.s32 %v200, 160
        %v221 = vadd.s32 %v200, 168
        %v222 = vadd.s32 %v200, 176
        %v223 = vadd.s32 %v200, 184
        %v224 = vadd.s32 %v200, 192
        %v225 = vadd.s32 %v200, 200
        %v226 = vadd.s32 %v200, 208
        %v227 = vadd.s32 %v200, 216
        %v228 = vadd.s32 %v200, 224
        %v229 = vadd.s32 %v200, 232
        %v230 = vadd.s32 %v200, 240
        %v231 = vadd.s32 %v200, 248
        %v232 = vlaneseq
        %v233 = vshrl.u32 %v232, 7
        %v234 = vsub.s32 0, %v233
        %v235 = vrot.slane %v197, %v234
        %v236 = vlaneseq
        %v237 = vshrl.u32 %v236, 7
        %v238 = vsub.s32 1, %v237
        %v239 = vrot.slane %v197, %v238
        %vm240 = vcmp.eq.s32.totalorder %v200, %v235
        %vm241 = vcmp.eq.s32.totalorder %v200, %v239
        %vm242 = vcmp.eq.s32.totalorder %v201, %v235
        %vm243 = vcmp.eq.s32.totalorder %v201, %v239
        %vm244 = vcmp.eq.s32.totalorder %v202, %v235
        %vm245 = vcmp.eq.s32.totalorder %v202, %v239
        %vm246 = vcmp.eq.s32.totalorder %v203, %v235
        %vm247 = vcmp.eq.s32.totalorder %v203, %v239
        %vm248 = vcmp.eq.s32.totalorder %v204, %v235
        %vm249 = vcmp.eq.s32.totalorder %v204, %v239
        %vm250 = vcmp.eq.s32.totalorder %v205, %v235
        %vm251 = vcmp.eq.s32.totalorder %v205, %v239
        %vm252 = vcmp.eq.s32.totalorder %v206, %v235
        %vm253 = vcmp.eq.s32.totalorder %v206, %v239
        %vm254 = vcmp.eq.s32.totalorder %v207, %v235
        %vm255 = vcmp.eq.s32.totalorder %v207, %v239
        %vm256 = vcmp.eq.s32.totalorder %v208, %v235
        %vm257 = vcmp.eq.s32.totalorder %v208, %v239
        %vm258 = vcmp.eq.s32.totalorder %v209, %v235
        %vm259 = vcmp.eq.s32.totalorder %v209, %v239
        %vm260 = vcmp.eq.s32.totalorder %v210, %v235
        %vm261 = vcmp.eq.s32.totalorder %v210, %v239
        %vm262 = vcmp.eq.s32.totalorder %v211, %v235
        %vm263 = vcmp.eq.s32.totalorder %v211, %v239
        %vm264 = vcmp.eq.s32.totalorder %v212, %v235
        %vm265 = vcmp.eq.s32.totalorder %v212, %v239
        %vm266 = vcmp.eq.s32.totalorder %v213, %v235
        %vm267 = vcmp.eq.s32.totalorder %v213, %v239
        %vm268 = vcmp.eq.s32.totalorder %v214, %v235
        %vm269 = vcmp.eq.s32.totalorder %v214, %v239
        %vm270 = vcmp.eq.s32.totalorder %v215, %v235
        %vm271 = vcmp.eq.s32.totalorder %v215, %v239
        %vm272 = vcmp.eq.s32.totalorder %v216, %v235
        %vm273 = vcmp.eq.s32.totalorder %v216, %v239
        %vm274 = vcmp.eq.s32.totalorder %v217, %v235
        %vm275 = vcmp.eq.s32.totalorder %v217, %v239
        %vm276 = vcmp.eq.s32.totalorder %v218, %v235
        %vm277 = vcmp.eq.s32.totalorder %v218, %v239
        %vm278 = vcmp.eq.s32.totalorder %v219, %v235
        %vm279 = vcmp.eq.s32.totalorder %v219, %v239
        %vm280 = vcmp.eq.s32.totalorder %v220, %v235
        %vm281 = vcmp.eq.s32.totalorder %v220, %v239
        %vm282 = vcmp.eq.s32.totalorder %v221, %v235
        %vm283 = vcmp.eq.s32.totalorder %v221, %v239
        %vm284 = vcmp.eq.s32.totalorder %v222, %v235
        %vm285 = vcmp.eq.s32.totalorder %v222, %v239
        %vm286 = vcmp.eq.s32.totalorder %v223, %v235
        %vm287 = vcmp.eq.s32.totalorder %v223, %v239
        %vm288 = vcmp.eq.s32.totalorder %v224, %v235
        %vm289 = vcmp.eq.s32.totalorder %v224, %v239
        %vm290 = vcmp.eq.s32.totalorder %v225, %v235
        %vm291 = vcmp.eq.s32.totalorder %v225, %v239
        %vm292 = vcmp.eq.s32.totalorder %v226, %v235
        %vm293 = vcmp.eq.s32.totalorder %v226, %v239
        %vm294 = vcmp.eq.s32.totalorder %v227, %v235
        %vm295 = vcmp.eq.s32.totalorder %v227, %v239
        %vm296 = vcmp.eq.s32.totalorder %v228, %v235
        %vm297 = vcmp.eq.s32.totalorder %v228, %v239
        %vm298 = vcmp.eq.s32.totalorder %v229, %v235
        %vm299 = vcmp.eq.s32.totalorder %v229, %v239
        %vm300 = vcmp.eq.s32.totalorder %v230, %v235
        %vm301 = vcmp.eq.s32.totalorder %v230, %v239
        %vm302 = vcmp.eq.s32.totalorder %v231, %v235
        %vm303 = vcmp.eq.s32.totalorder %v231, %v239
        %v304 = vsel %vm240, 1, 0
        %v305 = vsel %vm241, 1, 0
        %v306 = vsel %vm242, 1, 0
        %v307 = vsel %vm243, 1, 0
        %v308 = vsel %vm244, 1, 0
        %v309 = vsel %vm245, 1, 0
        %v310 = vsel %vm246, 1, 0
        %v311 = vsel %vm247, 1, 0
        %v312 = vsel %vm248, 1, 0
        %v313 = vsel %vm249, 1, 0
        %v314 = vsel %vm250, 1, 0
        %v315 = vsel %vm251, 1, 0
        %v316 = vsel %vm252, 1, 0
        %v317 = vsel %vm253, 1, 0
        %v318 = vsel %vm254, 1, 0
        %v319 = vsel %vm255, 1, 0
        %v320 = vsel %vm256, 1, 0
        %v321 = vsel %vm257, 1, 0
        %v322 = vsel %vm258, 1, 0
        %v323 = vsel %vm259, 1, 0
        %v324 = vsel %vm260, 1, 0
        %v325 = vsel %vm261, 1, 0
        %v326 = vsel %vm262, 1, 0
        %v327 = vsel %vm263, 1, 0
        %v328 = vsel %vm264, 1, 0
        %v329 = vsel %vm265, 1, 0
        %v330 = vsel %vm266, 1, 0
        %v331 = vsel %vm267, 1, 0
        %v332 = vsel %vm268, 1, 0
        %v333 = vsel %vm269, 1, 0
        %v334 = vsel %vm270, 1, 0
        %v335 = vsel %vm271, 1, 0
        %v336 = vsel %vm272, 1, 0
        %v337 = vsel %vm273, 1, 0
        %v338 = vsel %vm274, 1, 0
        %v339 = vsel %vm275, 1, 0
        %v340 = vsel %vm276, 1, 0
        %v341 = vsel %vm277, 1, 0
        %v342 = vsel %vm278, 1, 0
        %v343 = vsel %vm279, 1, 0
        %v344 = vsel %vm280, 1, 0
        %v345 = vsel %vm281, 1, 0
        %v346 = vsel %vm282, 1, 0
        %v347 = vsel %vm283, 1, 0
        %v348 = vsel %vm284, 1, 0
        %v349 = vsel %vm285, 1, 0
        %v350 = vsel %vm286, 1, 0
        %v351 = vsel %vm287, 1, 0
        %v352 = vsel %vm288, 1, 0
        %v353 = vsel %vm289, 1, 0
        %v354 = vsel %vm290, 1, 0
        %v355 = vsel %vm291, 1, 0
        %v356 = vsel %vm292, 1, 0
        %v357 = vsel %vm293, 1, 0
        %v358 = vsel %vm294, 1, 0
        %v359 = vsel %vm295, 1, 0
        %v360 = vsel %vm296, 1, 0
        %v361 = vsel %vm297, 1, 0
        %v362 = vsel %vm298, 1, 0
        %v363 = vsel %vm299, 1, 0
        %v364 = vsel %vm300, 1, 0
        %v365 = vsel %vm301, 1, 0
        %v366 = vsel %vm302, 1, 0
        %v367 = vsel %vm303, 1, 0
        %v368 = vcvt.s32.f32 %v304
        %v369 = vcvt.s32.f32 %v305
        %v370 = vcvt.s32.f32 %v306
        %v371 = vcvt.s32.f32 %v307
        %v372 = vcvt.s32.f32 %v308
        %v373 = vcvt.s32.f32 %v309
        %v374 = vcvt.s32.f32 %v310
        %v375 = vcvt.s32.f32 %v311
        %v376 = vcvt.s32.f32 %v312
        %v377 = vcvt.s32.f32 %v313
        %v378 = vcvt.s32.f32 %v314
        %v379 = vcvt.s32.f32 %v315
        %v380 = vcvt.s32.f32 %v316
        %v381 = vcvt.s32.f32 %v317
        %v382 = vcvt.s32.f32 %v318
        %v383 = vcvt.s32.f32 %v319
        %v384 = vcvt.s32.f32 %v320
        %v385 = vcvt.s32.f32 %v321
        %v386 = vcvt.s32.f32 %v322
        %v387 = vcvt.s32.f32 %v323
        %v388 = vcvt.s32.f32 %v324
        %v389 = vcvt.s32.f32 %v325
        %v390 = vcvt.s32.f32 %v326
        %v391 = vcvt.s32.f32 %v327
        %v392 = vcvt.s32.f32 %v328
        %v393 = vcvt.s32.f32 %v329
        %v394 = vcvt.s32.f32 %v330
        %v395 = vcvt.s32.f32 %v331
        %v396 = vcvt.s32.f32 %v332
        %v397 = vcvt.s32.f32 %v333
        %v398 = vcvt.s32.f32 %v334
        %v399 = vcvt.s32.f32 %v335
        %v400 = vcvt.s32.f32 %v336
        %v401 = vcvt.s32.f32 %v337
        %v402 = vcvt.s32.f32 %v338
        %v403 = vcvt.s32.f32 %v339
        %v404 = vcvt.s32.f32 %v340
        %v405 = vcvt.s32.f32 %v341
        %v406 = vcvt.s32.f32 %v342
        %v407 = vcvt.s32.f32 %v343
        %v408 = vcvt.s32.f32 %v344
        %v409 = vcvt.s32.f32 %v345
        %v410 = vcvt.s32.f32 %v346
        %v411 = vcvt.s32.f32 %v347
        %v412 = vcvt.s32.f32 %v348
        %v413 = vcvt.s32.f32 %v349
        %v414 = vcvt.s32.f32 %v350
        %v415 = vcvt.s32.f32 %v351
        %v416 = vcvt.s32.f32 %v352
        %v417 = vcvt.s32.f32 %v353
        %v418 = vcvt.s32.f32 %v354
        %v419 = vcvt.s32.f32 %v355
        %v420 = vcvt.s32.f32 %v356
        %v421 = vcvt.s32.f32 %v357
        %v422 = vcvt.s32.f32 %v358
        %v423 = vcvt.s32.f32 %v359
        %v424 = vcvt.s32.f32 %v360
        %v425 = vcvt.s32.f32 %v361
        %v426 = vcvt.s32.f32 %v362
        %v427 = vcvt.s32.f32 %v363
        %v428 = vcvt.s32.f32 %v364
        %v429 = vcvt.s32.f32 %v365
        %v430 = vcvt.s32.f32 %v366
        %v431 = vcvt.s32.f32 %v367
        %432 = vmatprep.subr.mxu0 %v369
        %433 = vmatpush1.msra.mxu0 %v368
        %434 = vmatprep.subr.mxu0 %v371
        %435 = vmatpush1.msra.mxu0 %v370
        %436 = vmatprep.subr.mxu0 %v373
        %437 = vmatpush1.msra.mxu0 %v372
        %438 = vmatprep.subr.mxu0 %v375
        %439 = vmatpush1.msra.mxu0 %v374
        %440 = vmatprep.subr.mxu0 %v377
        %441 = vmatpush1.msra.mxu0 %v376
        %442 = vmatprep.subr.mxu0 %v379
        %443 = vmatpush1.msra.mxu0 %v378
        %444 = vmatprep.subr.mxu0 %v381
        %445 = vmatpush1.msra.mxu0 %v380
        %446 = vmatprep.subr.mxu0 %v383
        %447 = vmatpush1.msra.mxu0 %v382
        %448 = vmatprep.subr.mxu0 %v385
        %449 = vmatpush1.msra.mxu0 %v384
        %450 = vmatprep.subr.mxu0 %v387
        %451 = vmatpush1.msra.mxu0 %v386
        %452 = vmatprep.subr.mxu0 %v389
        %453 = vmatpush1.msra.mxu0 %v388
        %454 = vmatprep.subr.mxu0 %v391
        %455 = vmatpush1.msra.mxu0 %v390
        %456 = vmatprep.subr.mxu0 %v393
        %457 = vmatpush1.msra.mxu0 %v392
        %458 = vmatprep.subr.mxu0 %v395
        %459 = vmatpush1.msra.mxu0 %v394
        %460 = vmatprep.subr.mxu0 %v397
        %461 = vmatpush1.msra.mxu0 %v396
        %462 = vmatprep.subr.mxu0 %v399
        %463 = vmatpush1.msra.mxu0 %v398
        %464 = vmatprep.subr.mxu0 %v401
        %465 = vmatpush1.msra.mxu0 %v400
        %466 = vmatprep.subr.mxu0 %v403
        %467 = vmatpush1.msra.mxu0 %v402
        %468 = vmatprep.subr.mxu0 %v405
        %469 = vmatpush1.msra.mxu0 %v404
        %470 = vmatprep.subr.mxu0 %v407
        %471 = vmatpush1.msra.mxu0 %v406
        %472 = vmatprep.subr.mxu0 %v409
        %473 = vmatpush1.msra.mxu0 %v408
        %474 = vmatprep.subr.mxu0 %v411
        %475 = vmatpush1.msra.mxu0 %v410
        %476 = vmatprep.subr.mxu0 %v413
        %477 = vmatpush1.msra.mxu0 %v412
        %478 = vmatprep.subr.mxu0 %v415
        %479 = vmatpush1.msra.mxu0 %v414
        %480 = vmatprep.subr.mxu0 %v417
        %481 = vmatpush1.msra.mxu0 %v416
        %482 = vmatprep.subr.mxu0 %v419
        %483 = vmatpush1.msra.mxu0 %v418
        %484 = vmatprep.subr.mxu0 %v421
        %485 = vmatpush1.msra.mxu0 %v420
        %486 = vmatprep.subr.mxu0 %v423
        %487 = vmatpush1.msra.mxu0 %v422
        %488 = vmatprep.subr.mxu0 %v425
        %489 = vmatpush1.msra.mxu0 %v424
        %490 = vmatprep.subr.mxu0 %v427
        %491 = vmatpush1.msra.mxu0 %v426
        %492 = vmatprep.subr.mxu0 %v429
        %493 = vmatpush1.msra.mxu0 %v428
        %494 = vmatprep.subr.mxu0 %v431
        %495 = vmatpush1.msra.mxu0 %v430
        %496 = vmatprep.mubr.f32.mxu0 %v188
        %497 = vmatmul.mubr.f32.gmra.mrb[0].mxu0 %v187
        %v498 = vpop.f32.mrb[0].mxu0
        %v499 = vadd.f32 0.0, %v498
        %v500 = vpop.f32.mrb[0].mxu0
        %v501 = vadd.f32 0.0, %v500
        %502 = vmatprep.mubr.f32.mxu0 %v190
        %503 = vmatmul.mubr.f32.gmra.mrb[0].mxu0 %v189
        %v504 = vpop.f32.mrb[0].mxu0
        %v505 = vadd.f32 0.0, %v504
        %v506 = vpop.f32.mrb[0].mxu0
        %v507 = vadd.f32 0.0, %v506
        %508 = vmatprep.mubr.f32.mxu0 %v192
        %509 = vmatmul.mubr.f32.gmra.mrb[0].mxu0 %v191
        %v510 = vpop.f32.mrb[0].mxu0
        %v511 = vadd.f32 0.0, %v510
        %v512 = vpop.f32.mrb[0].mxu0
        %v513 = vadd.f32 0.0, %v512
        %514 = vmatprep.mubr.f32.mxu0 %v194
        %515 = vmatmul.mubr.f32.gmra.mrb[0].mxu0 %v193
        %v516 = vpop.f32.mrb[0].mxu0
        %v517 = vadd.f32 0.0, %v516
        %v518 = vpop.f32.mrb[0].mxu0
        %v519 = vadd.f32 0.0, %v518
        %520 = vmatprep.mubr.f32.mxu0 %v196
        %521 = vmatmul.mubr.f32.gmra.mrb[0].mxu0 %v195
        %v522 = vpop.f32.mrb[0].mxu0
        %v523 = vpop.f32.mrb[0].mxu0
        %v524 = vadd.f32 0.0, %v523
        %525 = vdwg.mxu0
        %v526 = vmul.f32 %v499, %v501
        %v527 = vmul.f32 %v505, %v507
        %v528 = vmul.f32 %v511, %v513
        %v529 = vmul.f32 %v517, %v519
        %v530 = vadd.f32 %v526, %v527
        %v531 = vadd.f32 %v530, %v528
        %v532 = vadd.f32 %v531, %v529
        %v533 = vrot.slane %v532, 4
        %v534 = vadd.f32 %v532, %v533
        %v535 = vrot.slane %v534, 2
        %v536 = vadd.f32 %v534, %v535
        %v537 = vrot.slane %v536, 1
        %v538 = vadd.f32 %v536, %v537
        %v539 = vadd.f32 %v538, %v524
        %v540 = vmax.f32 %v539, 0.0
        %v541 = vmul.f32 %v539, %v198
        %v542 = vsub.f32 %v540, %v541
        %v543 = vand.u32 2147483647, %v539
        %v544 = vsub.f32 0.0, %v543
        %v545 = vmul.f32 %v544, 1.442695
        %v546 = vpow.pop %v545
        %v547 = vadd.f32 %v546, 1.0
        %v548 = vlog2.pop %v547
        %v549 = vmul.f32 %v548, 0.6931472
        %v550 = vmul.f32 -0.5, %v546
        %v551 = vadd.f32 %v550, 1.0
        %v552 = vmul.f32 %v551, %v546
        %v553 = vand.u32 2147483647, %v546
        %vm554 = vcmp.lt.f32.partialorder %v553, 0.0004427343
        %v555 = vsel %vm554, %v552, %v549
        %v556 = vadd.f32 %v542, %v555
        %v558 = vlaneseq
        %v559 = vshrl.u32 %v558, 7
        %v560 = vsub.s32 1, %v559
        %v561 = vrot.slane %v198, %v560
        %v563 = vmul.f32 %v556, %v561
        %v564 = vmul.f32 %v499, %v499
        %v565 = vmul.f32 %v505, %v505
        %v566 = vmul.f32 %v511, %v511
        %v567 = vmul.f32 %v517, %v517
        %v568 = vmul.f32 %v501, %v501
        %v569 = vmul.f32 %v507, %v507
        %v570 = vmul.f32 %v513, %v513
        %v571 = vmul.f32 %v519, %v519
        %v572 = vadd.f32 %v564, %v568
        %v573 = vadd.f32 %v565, %v569
        %v574 = vadd.f32 %v566, %v570
        %v575 = vadd.f32 %v567, %v571
        %v576 = vadd.f32 %v572, %v573
        %v577 = vadd.f32 %v576, %v574
        %v578 = vadd.f32 %v577, %v575
        %v579 = vrot.slane %v578, 4
        %v580 = vadd.f32 %v578, %v579
        %v581 = vrot.slane %v580, 2
        %v582 = vadd.f32 %v580, %v581
        %v583 = vrot.slane %v582, 1
        %v584 = vadd.f32 %v582, %v583
        %v585 = vmul.f32 %v524, %v524
        %v586 = vadd.f32 %v584, %v585
        %v587 = vmul.f32 %v586, %v561
        %v588 = vld [vmem:[#allocation3] sm:$0x1]
        %v589 = vadd.f32 %v588, %v563
        %590 = vst [vmem:[#allocation3] sm:$0x1] %v589
        %v591 = vld [vmem:[#allocation4] sm:$0x1]
        %v592 = vadd.f32 %v591, %v587
        %593 = vst [vmem:[#allocation4] sm:$0x1] %v592
        %p594 = scmp.eq.s32.totalorder %s18, 2
        // Predicated region
        $region41: #{tpu_custom_call.1} parent=27 // pred_check
          %p595 = pneg %p594
        $region42: #{tpu_custom_call.1} parent=27 // pred_check_branch
          %597 = sbr.rel (%p595) target = $region44
        $region43: #{tpu_custom_call.1} parent=27 // pred_region
          %v598 = vld [vmem:[#allocation3] sm:$0x1]
          %vm599 = vcmask 1040384
          %v600 = vsel %vm599, %v598, 0.0
          %601 = vadd.xlane.f32.xlu0 %v600
          %v602 = vpop.xlane.xlu0 %601
          %v603 = vrot.slane %v602, 4
          %v604 = vadd.f32 %v602, %v603
          %v605 = vrot.slane %v604, 2
          %v606 = vadd.f32 %v604, %v605
          %v607 = vrot.slane %v606, 1
          %v608 = vadd.f32 %v606, %v607
          %s609 = vtos %v608
          %s610 = smul.f32 %s609, 0.0033333334
          %v611 = vld [vmem:[#allocation4] sm:$0x1]
          %v612 = vsel %vm599, %v611, 0.0
          %613 = vadd.xlane.f32.xlu0 %v612
          %v614 = vpop.xlane.xlu0 %613
          %v615 = vrot.slane %v614, 4
          %v616 = vadd.f32 %v614, %v615
          %v617 = vrot.slane %v616, 2
          %v618 = vadd.f32 %v616, %v617
          %v619 = vrot.slane %v618, 1
          %v620 = vadd.f32 %v618, %v619
          %s621 = vtos %v620
          %s622 = smul.f32 %s621, 5e-06
          %s623 = sadd.f32 %s610, %s622
          %s624 = scalar_lea.smem [#allocation9], 0
          %625 = sst [smem:[%s624]] %s623
        $region44: #{tpu_custom_call.1} parent=27 // pred_fallthru
          _
        // Predicated region
        $region45: #{tpu_custom_call.1} parent=27 // pred_check
          %p626 = pneg %p83
        $region46: #{tpu_custom_call.1} parent=27 // pred_check_branch
          %628 = sbr.rel (%p626) target = $region48
        $region47: #{tpu_custom_call.1} parent=27 // pred_region
          %s630 = ssub.s32 16, 16
          %631 = vsyncadd [#allocation8], %s630
          %634 = dma.smem_to_hbm [#allocation9], 16, %s3, [#allocation8]
        $region48: #{tpu_custom_call.1} parent=27 // pred_fallthru
          _
        // Predicated region
        $region49: #{tpu_custom_call.1} parent=27 // pred_check
          %p635 = pneg %p83
        $region50: #{tpu_custom_call.1} parent=27 // pred_check_branch
          %637 = sbr.rel (%p635) target = $region52
        $region51: #{tpu_custom_call.1} parent=27 // pred_region
          %638 = dma.done [#allocation8], 16
        $region52: #{tpu_custom_call.1} parent=27 // pred_fallthru
          _
        %639 = sfence
      $region28: #{tpu_custom_call.1} parent=5 // pred_fallthru
        _
      %p640 = scmp.le.s32.totalorder 2, %s13
      // Predicated region
      $region53: #{tpu_custom_call.1} parent=5 // pred_check
        %p641 = pneg %p640
      $region54: #{tpu_custom_call.1} parent=5 // pred_check_branch
        %643 = sbr.rel (%p641) target = $region56
      $region55: #{tpu_custom_call.1} parent=5 // pred_region
        %s644 = ssub.s32 %s13, 2
      $region56: #{tpu_custom_call.1} parent=5 // pred_fallthru
        _
    $region6: #{tpu_custom_call.1} parent=1 // loop_footer
      %s17 = sadd.s32 1, %s13
    $region7: #{tpu_custom_call.1} parent=1 // loop_footer_branch
      %12 = sbr.rel target = $region3
    $region8: #{tpu_custom_call.1} parent=1 // loop_exit
      _
    %645 = vsyncpa [#allocation7], 1
    %s646 = scalar_lea.sflag [#allocation7], 1
    %647 = vsyncpa %s646, 1
    %648 = vsyncpa [#allocation8], 1
    %s649 = scalar_lea.sflag [#allocation8], 1
    %650 = vsyncpa %s649, 1
  %651 = vsyncmov [#allocation5]
  %s652 = vpop.sfrf %651
  %p653 = scmp.eq.s32.totalorder %s652, 0
  %p654 = pneg %p653
  %656 = shalt.err (%p654)

</llo_original>
